<compile_context>
chip_gen: v6e
topology: v6e:2x2x1
jax: 0.10.0
libtpu: 0.0.40
codegen_flags: <defaults>
</compile_context>

<pallas_src>
import functools

import jax
import jax.numpy as jnp
from jax.experimental import pallas as pl
from jax.experimental.pallas import tpu as pltpu


def _round_up(x, m):
    return ((x + m - 1) // m) * m


def _pad2d(x, rows, cols):
    return jnp.pad(x, ((0, rows - x.shape[0]), (0, cols - x.shape[1])))


def _itemsize(dtype):
    return 2 if dtype == jnp.bfloat16 else 4


def _pick_row_tile(n_pad):
    # Prefer >=2 row blocks (v7x dual-TC) with bm a multiple of 16 (bf16 packing).
    for bm in (256, 128, 64, 32, 16):
        if n_pad % bm == 0 and n_pad // bm >= 2:
            return bm
    return n_pad


# ---------------------------------------------------------------------------
# Kernel 1: feature transform  XW' = dinv ⊙ (X @ W)   (row-tiled, bf16 output)
# ---------------------------------------------------------------------------
def _xw_kernel(x_ref, w_ref, dinv_ref, o_ref):
    xw = jnp.dot(x_ref[...], w_ref[...], preferred_element_type=jnp.float32)
    o_ref[...] = (xw * dinv_ref[...]).astype(o_ref.dtype)


def _feature_transform(x_pad, w_pad, dinv_pad, bm):
    n_pad, f_in_pad = x_pad.shape
    f_out_pad = w_pad.shape[1]
    return pl.pallas_call(
        _xw_kernel,
        out_shape=jax.ShapeDtypeStruct((n_pad, f_out_pad), jnp.bfloat16),
        grid=(n_pad // bm,),
        in_specs=[
            pl.BlockSpec((bm, f_in_pad), lambda i: (i, 0)),
            pl.BlockSpec((f_in_pad, f_out_pad), lambda i: (0, 0)),
            pl.BlockSpec((bm, 1), lambda i: (i, 0)),
        ],
        out_specs=pl.BlockSpec((bm, f_out_pad), lambda i: (i, 0)),
        compiler_params=pltpu.CompilerParams(
            dimension_semantics=("parallel",)),
    )(x_pad, w_pad, dinv_pad)


# ---------------------------------------------------------------------------
# Kernel 2a: aggregation with VMEM-resident XW  (1-D row grid, no scratch)
#   out = dinv ⊙ ((A+I) @ XW') + b   (+ ReLU)
# ---------------------------------------------------------------------------
def _agg_resident_kernel(a_ref, xw_ref, dinv_ref, b_ref, o_ref, *, apply_relu):
    acc = jnp.dot(a_ref[...], xw_ref[...], preferred_element_type=jnp.float32)
    out = acc * dinv_ref[...] + b_ref[...]
    if apply_relu:
        out = jnp.maximum(out, 0.0)
    o_ref[...] = out.astype(o_ref.dtype)


# ---------------------------------------------------------------------------
# Kernel 2b: streaming fallback (2-D grid, f32 accumulator).  Scratch is kept
# here because the hidden layer's output is bf16 (needs f32 accumulation).
# ---------------------------------------------------------------------------
def _agg_stream_kernel(a_ref, xw_ref, dinv_ref, b_ref, o_ref, acc_ref, *,
                       apply_relu):
    k = pl.program_id(1)

    @pl.when(k == 0)
    def _():
        acc_ref[...] = jnp.zeros_like(acc_ref)

    acc_ref[...] += jnp.dot(
        a_ref[...], xw_ref[...], preferred_element_type=jnp.float32)

    @pl.when(k == pl.num_programs(1) - 1)
    def _():
        out = acc_ref[...] * dinv_ref[...] + b_ref[...]
        if apply_relu:
            out = jnp.maximum(out, 0.0)
        o_ref[...] = out.astype(o_ref.dtype)


def _aggregate(a_pad, xw, dinv_pad, b_pad, apply_relu, bm, bk, out_dtype):
    n_pad = a_pad.shape[0]
    f_out_pad = xw.shape[1]
    num_row = n_pad // bm
    out_isz = _itemsize(out_dtype)

    if bk is None:
        # ---- resident-XW path: XW fetched once (constant block index) ----
        kernel = functools.partial(_agg_resident_kernel, apply_relu=apply_relu)
        vmem = (2 * bm * n_pad * 2              # A row-slab, double-buffered
                + 2 * n_pad * f_out_pad * 2     # resident XW (conservative 2x)
                + 2 * bm * f_out_pad * out_isz  # output tile, double-buffered
                + 2 * (bm * 4 + f_out_pad * 4))  # dinv + bias
        vmem = int(min(max(vmem + (2 << 20), 16 << 20), 48 << 20))
        cost = pl.CostEstimate(
            flops=2 * n_pad * n_pad * f_out_pad,
            transcendentals=0,
            bytes_accessed=int(a_pad.size * 2 + xw.size * 2
                               + n_pad * f_out_pad * out_isz),
        )
        return pl.pallas_call(
            kernel,
            out_shape=jax.ShapeDtypeStruct((n_pad, f_out_pad), out_dtype),
            grid=(num_row,),
            in_specs=[
                pl.BlockSpec((bm, n_pad), lambda i: (i, 0)),       # A row slab
                pl.BlockSpec((n_pad, f_out_pad), lambda i: (0, 0)),  # resident XW
                pl.BlockSpec((bm, 1), lambda i: (i, 0)),           # dinv rows
                pl.BlockSpec((1, f_out_pad), lambda i: (0, 0)),    # bias
            ],
            out_specs=pl.BlockSpec((bm, f_out_pad), lambda i: (i, 0)),
            compiler_params=pltpu.CompilerParams(
                dimension_semantics=("parallel",),
                vmem_limit_bytes=vmem),
            cost_estimate=cost,
        )(a_pad, xw, dinv_pad, b_pad)

    # ---- streaming path for very large graphs ----
    num_k = n_pad // bk
    kernel = functools.partial(_agg_stream_kernel, apply_relu=apply_relu)
    vmem = (2 * bm * bk * 2 + 2 * bk * f_out_pad * 2
            + 2 * bm * f_out_pad * out_isz
            + bm * f_out_pad * 4                       # f32 accumulator
            + 2 * (bm * 4 + f_out_pad * 4))
    vmem = int(min(max(vmem + (2 << 20), 16 << 20), 48 << 20))
    cost = pl.CostEstimate(
        flops=2 * n_pad * n_pad * f_out_pad,
        transcendentals=0,
        bytes_accessed=int(a_pad.size * 2 + num_row * xw.size * 2
                           + n_pad * f_out_pad * out_isz),
    )
    return pl.pallas_call(
        kernel,
        out_shape=jax.ShapeDtypeStruct((n_pad, f_out_pad), out_dtype),
        grid=(num_row, num_k),
        in_specs=[
            pl.BlockSpec((bm, bk), lambda i, k: (i, k)),          # A tile
            pl.BlockSpec((bk, f_out_pad), lambda i, k: (k, 0)),   # XW k-slab
            pl.BlockSpec((bm, 1), lambda i, k: (i, 0)),           # dinv rows
            pl.BlockSpec((1, f_out_pad), lambda i, k: (0, 0)),    # bias
        ],
        out_specs=pl.BlockSpec((bm, f_out_pad), lambda i, k: (i, 0)),
        scratch_shapes=[pltpu.VMEM((bm, f_out_pad), jnp.float32)],
        compiler_params=pltpu.CompilerParams(
            dimension_semantics=("parallel", "arbitrary"),
            vmem_limit_bytes=vmem),
        cost_estimate=cost,
    )(a_pad, xw, dinv_pad, b_pad)


# ---------------------------------------------------------------------------
# One GCNConv layer (x_slab already padded, bf16)
# ---------------------------------------------------------------------------
def gcn_layer(a_pad, dinv_pad, x_slab, w, b, *, apply_relu, bm, bk, out_dtype):
    f_in, f_out = w.shape
    f_in_pad = x_slab.shape[1]
    f_out_pad = _round_up(f_out, 128)

    w_pad = _pad2d(w.astype(jnp.float32), f_in_pad, f_out_pad).astype(jnp.bfloat16)
    b_pad = jnp.pad(b.astype(jnp.float32), (0, f_out_pad - f_out)).reshape(
        1, f_out_pad)

    xw = _feature_transform(x_slab, w_pad, dinv_pad, bm)   # dinv-scaled, bf16
    return _aggregate(a_pad, xw, dinv_pad, b_pad, apply_relu, bm, bk, out_dtype)


# ---------------------------------------------------------------------------
# Glue: raw (A+I) count adjacency in bf16 + D^-1/2 vector (O(E) scatter only).
# ---------------------------------------------------------------------------
def build_adjacency_and_dinv(edge_index, num_nodes, n_pad):
    src = edge_index[0]
    dst = edge_index[1]
    loops = jnp.arange(num_nodes, dtype=edge_index.dtype)
    src_l = jnp.concatenate([src, loops])
    dst_l = jnp.concatenate([dst, loops])

    # Raw count adjacency (A + I), built directly at padded size in bf16
    # (small integer counts are exact in bf16).
    a = jnp.zeros((n_pad, n_pad), jnp.bfloat16).at[dst_l, src_l].add(1.0)

    # Degrees via a 1-D O(E) scatter (no extra O(N^2) f32 pass).
    deg = jnp.zeros((num_nodes,), jnp.float32).at[dst_l].add(1.0)
    dinv = jnp.where(deg > 0, jax.lax.rsqrt(deg), 0.0)
    dinv_pad = jnp.zeros((n_pad, 1), jnp.float32).at[:num_nodes, 0].set(dinv)
    return a, dinv_pad


# ---------------------------------------------------------------------------
# Full GCN forward:  conv2(relu(conv1(x)))
# ---------------------------------------------------------------------------
def gcn_forward(x, edge_index, params):
    n, f_in = x.shape
    hid = params["w1"].shape[1]
    f_out = params["w2"].shape[1]

    f_out_pad_max = _round_up(max(hid, f_out), 128)

    # Residency decision: keep XW fully VMEM-resident whenever it is small.
    n_tmp = _round_up(max(n, 32), 32)
    resident = (n_tmp * f_out_pad_max * 2) <= (4 << 20) and n_tmp <= 16384
    if resident:
        n_pad = n_tmp
        bm, bk = _pick_row_tile(n_pad), None
    else:
        n_pad = _round_up(max(n, 512), 512)
        bm, bk = 256, 512

    a_pad, dinv_pad = build_adjacency_and_dinv(edge_index, n, n_pad)

    f_in_pad = _round_up(f_in, 128)
    x_slab = _pad2d(x.astype(jnp.float32), n_pad, f_in_pad).astype(jnp.bfloat16)

    # Layer 1: hidden stays padded + bf16 and is fed directly into layer 2.
    h = gcn_layer(a_pad, dinv_pad, x_slab, params["w1"], params["b1"],
                  apply_relu=True, bm=bm, bk=bk, out_dtype=jnp.bfloat16)
    out_pad = gcn_layer(a_pad, dinv_pad, h, params["w2"], params["b2"],
                        apply_relu=False, bm=bm, bk=bk, out_dtype=jnp.float32)
    return out_pad[:n, :f_out]


def init_params(key, in_channels, hidden_channels, out_channels):
    k1, k2, k3, k4 = jax.random.split(key, 4)
    w1 = jax.random.normal(k1, (in_channels, hidden_channels), jnp.float32) * (
        (2.0 / (in_channels + hidden_channels)) ** 0.5)
    w2 = jax.random.normal(k2, (hidden_channels, out_channels), jnp.float32) * (
        (2.0 / (hidden_channels + out_channels)) ** 0.5)
    b1 = jax.random.normal(k3, (hidden_channels,), jnp.float32) * 0.01
    b2 = jax.random.normal(k4, (out_channels,), jnp.float32) * 0.01
    return {"w1": w1, "b1": b1, "w2": w2, "b2": b2}


if __name__ == "__main__":
    key = jax.random.PRNGKey(0)
    k_x, k_e, k_p = jax.random.split(key, 3)

    num_nodes = 16
    num_edges = 32
    in_channels, hidden_channels, out_channels = 8, 16, 4

    x = jax.random.normal(k_x, (num_nodes, in_channels), jnp.float32)
    edge_index = jax.random.randint(k_e, (2, num_edges), 0, num_nodes,
                                    dtype=jnp.int32)

    params = init_params(k_p, in_channels, hidden_channels, out_channels)

    out = jax.block_until_ready(gcn_forward(x, edge_index, params))

    assert out.shape == (num_nodes, out_channels)
    assert jnp.all(jnp.isfinite(out))

    # Pure-JAX f32 reference (PyG GCNConv semantics); bf16-tolerant check.
    def ref_forward(x, edge_index, params):
        src, dst = edge_index[0], edge_index[1]
        loops = jnp.arange(num_nodes, dtype=edge_index.dtype)
        src = jnp.concatenate([src, loops])
        dst = jnp.concatenate([dst, loops])
        a = jnp.zeros((num_nodes, num_nodes), jnp.float32).at[dst, src].add(1.0)
        deg = a.sum(axis=1)
        dinv = jnp.where(deg > 0, jax.lax.rsqrt(deg), 0.0)
        a_hat = dinv[:, None] * a * dinv[None, :]
        h = jnp.maximum(a_hat @ (x @ params["w1"]) + params["b1"], 0.0)
        return a_hat @ (h @ params["w2"]) + params["b2"]

    ref = ref_forward(x, edge_index, params)
    assert jnp.allclose(out, ref, atol=1e-1, rtol=1e-1), (
        float(jnp.max(jnp.abs(out - ref))))

    print("KERNEL_OK")
</pallas_src>

<mosaic_0001>
module attributes {stable_mosaic.version = 11 : i64} {
  func.func @_xw_kernel(%arg0: i32, %arg1: memref<16x128xbf16, #tpu.memory_space<vmem>>, %arg2: memref<128x128xbf16, #tpu.memory_space<vmem>>, %arg3: memref<16x1xf32, #tpu.memory_space<vmem>>, %arg4: memref<16x128xbf16, #tpu.memory_space<vmem>>) attributes {dimension_semantics = [#tpu.dimension_semantics<parallel>], iteration_bounds = array<i64: 2>, scalar_prefetch = 0 : i64, scratch_operands = 0 : i64, tpu.core_type = #tpu.core_type<tc>, window_params = [{transform_indices = @transform_0, window_bounds = array<i64: 16, 128>}, {pipeline_mode = #tpu.pipeline_mode<synchronous>, transform_indices = @transform_1, window_bounds = array<i64: 128, 128>}, {transform_indices = @transform_2, window_bounds = array<i64: 16, 1>}, {transform_indices = @transform_3, window_bounds = array<i64: 16, 128>}]} {
    %c0 = arith.constant 0 : index
    %c0_0 = arith.constant 0 : index
    %0 = vector.load %arg1[%c0, %c0_0] : memref<16x128xbf16, #tpu.memory_space<vmem>>, vector<16x128xbf16>
    %c0_1 = arith.constant 0 : index
    %c0_2 = arith.constant 0 : index
    %1 = vector.load %arg2[%c0_1, %c0_2] : memref<128x128xbf16, #tpu.memory_space<vmem>>, vector<128x128xbf16>
    %cst = arith.constant dense<0.000000e+00> : vector<16x128xf32>
    %2 = tpu.matmul %0, %1, %cst {dimension_numbers = #tpu.dot_dimension_numbers<[1], [0], [0], [1], [0, 0, 1, 1], [], []>} : vector<16x128xbf16>, vector<128x128xbf16>, vector<16x128xf32> -> vector<16x128xf32>
    %c0_3 = arith.constant 0 : index
    %c0_4 = arith.constant 0 : index
    %3 = vector.load %arg3[%c0_3, %c0_4] : memref<16x1xf32, #tpu.memory_space<vmem>>, vector<16x1xf32>
    %4 = vector.broadcast %3 : vector<16x1xf32> to vector<16x128xf32>
    %5 = arith.mulf %2, %4 : vector<16x128xf32>
    %6 = arith.truncf %5 : vector<16x128xf32> to vector<16x128xbf16>
    %c0_5 = arith.constant 0 : index
    %c0_6 = arith.constant 0 : index
    %7 = vector.load %arg4[%c0_5, %c0_6] : memref<16x128xbf16, #tpu.memory_space<vmem>>, vector<16x128xbf16>
    tpu.vector_store %arg4[%c0_5, %c0_6], %6 {strides = array<i32>} : memref<16x128xbf16, #tpu.memory_space<vmem>>, vector<16x128xbf16>,
    return
  }
  func.func @transform_0(%arg0: i32) -> (i32, i32) {
    %c0_i32 = arith.constant 0 : i32
    %c0_i32_0 = arith.constant 0 : i32
    return %arg0, %c0_i32 : i32, i32
  }
  func.func @transform_1(%arg0: i32) -> (i32, i32) {
    %c0_i32 = arith.constant 0 : i32
    %c0_i32_0 = arith.constant 0 : i32
    %c0_i32_1 = arith.constant 0 : i32
    return %c0_i32, %c0_i32_0 : i32, i32
  }
  func.func @transform_2(%arg0: i32) -> (i32, i32) {
    %c0_i32 = arith.constant 0 : i32
    %c0_i32_0 = arith.constant 0 : i32
    return %arg0, %c0_i32 : i32, i32
  }
  func.func @transform_3(%arg0: i32) -> (i32, i32) {
    %c0_i32 = arith.constant 0 : i32
    %c0_i32_0 = arith.constant 0 : i32
    return %arg0, %c0_i32 : i32, i32
  }
}

</mosaic_0001>

<llo_original>
// kernel: tpu_custom_call.1
$region0: #{tpu_custom_call.1}
  #allocation0 [shape = 'u32[]', space=smem, size = 0x4, offset = 0x4, fixed_abs, tag = 'smem constant byte address 0x4 - core index']
  #allocation1 [shape = 'u32[144,128]{1,0:T(1,128)}', space=vmem, size = 0x12000, scoped, tag = 'internal scratch']
  %s0 = inlined_call_operand.vmem [shape: bf16[32,128], index: 0, kind: input, shape index: {}]
  %s1 = inlined_call_operand.hbm [shape: bf16[128,128], index: 1, kind: input, shape index: {}]
  %s2 = inlined_call_operand.vmem [shape: f32[32,1], index: 2, kind: input, shape index: {}]
  %s3 = inlined_call_operand.hbm [shape: bf16[32,128], index: 3, kind: output, shape index: {}]
  %s4 = sld [smem:[#allocation0]]
  $region49: #{tpu_custom_call.1} parent=0
    _
  %s6 = ssub.s32 1, %s4
  %s7 = scalar_select 0, %s6, %s4
  $region1: #{tpu_custom_call.1} parent=0
    #allocation2 [shape = 'u8[32768]{0}', space=vmem, size = 0x8000, scoped, tag = 'input window, operand 1, single buffered']
    #allocation3 [shape = 's32[2]{0}', space=sflag, size = 0x8, scoped, tag = 'scoped memory for tpu_custom_call.1']
    #allocation4 [shape = 's32[2]{0}', space=sflag, size = 0x8, scoped, tag = 'scoped memory for tpu_custom_call.1']
    #allocation5 [shape = 'u8[8192]{0}', space=vmem, size = 0x2000, scoped, tag = 'output window, operand 0']
    %8 = vsyncpa [#allocation3], 0
    %9 = vsyncpa [#allocation4], 0
    %s10 = scalar_lea.sflag [#allocation4], 1
    %11 = vsyncpa %s10, 0
    loop: start=0, step=1, limit=4
    $region2: #{tpu_custom_call.1} parent=1 // loop_pre_header
      _
    $region3: #{tpu_custom_call.1} parent=1 // loop_header
      %s13 = sphi 0, %s17
      %p14 = scmp.ge.s32.totalorder %s13, 4
      %s23 = sphi 0, %s25
      %s26 = sphi 0, %s23
      %s27 = sphi 0, %s26
      %s43 = sphi 0, %s27
      %s47 = sphi 0, %s47
      %s49 = sphi 0, %s47
      %s50 = sphi 0, %s49
      %s64 = sphi 0, %s50
      %s70 = sphi 0, %s72
      %s73 = sphi 0, %s70
      %s74 = sphi 0, %s73
      %s90 = sphi 0, %s74
      %s96 = sphi 0, %s98
      %s99 = sphi 0, %s96
      %s100 = sphi 0, %s99
      %s116 = sphi 0, %s100
    $region4: #{tpu_custom_call.1} parent=1 // loop_header_branch
      %16 = sbr.rel (%p14) target = $region8
    $region5: #{tpu_custom_call.1} parent=1 // loop_body
      %s18 = ssub.s32 %s13, 1
      %s19 = ssub.s32 %s13, 2
      %s20 = sadd.s32 %s13, 1
      %s21 = ssub.s32 %s13, %s20
      %p22 = scmp.eq.s32.totalorder %s21, 0
      %s24 = sadd.s32 %s23, 1
      %s25 = scalar_select %p22, %s23, %s24
      %p28 = pneg %p22
      %p29 = scmp.eq.s32.totalorder %s13, 1
      %p30 = por %p28, %p29
      %p31 = scmp.ne.s32.totalorder %s23, %s26
      %p32 = scmp.eq.s32.totalorder %s13, 0
      %p33 = por %p31, %p32
      %p34 = scmp.ne.s32.totalorder %s23, %s26
      %p35 = scmp.eq.s32.totalorder %s18, 1
      %p36 = por %p34, %p35
      %p37 = scmp.ne.s32.totalorder %s26, %s27
      %p38 = scmp.eq.s32.totalorder %s18, 0
      %p39 = por %p37, %p38
      %p40 = scmp.ne.s32.totalorder %s26, %s27
      %p41 = scmp.eq.s32.totalorder %s19, 1
      %p42 = por %p40, %p41
      %p44 = scmp.ne.s32.totalorder %s27, %s43
      %p45 = scmp.eq.s32.totalorder %s19, 0
      %p46 = por %p44, %p45
      %s48 = sadd.s32 %s47, 1
      %p51 = scmp.eq.s32.totalorder %s13, 1
      %p52 = scmp.ne.s32.totalorder %s47, %s49
      %p53 = scmp.eq.s32.totalorder %s13, 0
      %p54 = por %p52, %p53
      %p55 = scmp.ne.s32.totalorder %s47, %s49
      %p56 = scmp.eq.s32.totalorder %s18, 1
      %p57 = por %p55, %p56
      %p58 = scmp.ne.s32.totalorder %s49, %s50
      %p59 = scmp.eq.s32.totalorder %s18, 0
      %p60 = por %p58, %p59
      %p61 = scmp.ne.s32.totalorder %s49, %s50
      %p62 = scmp.eq.s32.totalorder %s19, 1
      %p63 = por %p61, %p62
      %p65 = scmp.ne.s32.totalorder %s50, %s64
      %p66 = scmp.eq.s32.totalorder %s19, 0
      %p67 = por %p65, %p66
      %s68 = ssub.s32 %s13, %s20
      %p69 = scmp.eq.s32.totalorder %s68, 0
      %s71 = sadd.s32 %s70, 1
      %s72 = scalar_select %p69, %s70, %s71
      %p75 = pneg %p69
      %p76 = scmp.eq.s32.totalorder %s13, 1
      %p77 = por %p75, %p76
      %p78 = scmp.ne.s32.totalorder %s70, %s73
      %p79 = scmp.eq.s32.totalorder %s13, 0
      %p80 = por %p78, %p79
      %p81 = scmp.ne.s32.totalorder %s70, %s73
      %p82 = scmp.eq.s32.totalorder %s18, 1
      %p83 = por %p81, %p82
      %p84 = scmp.ne.s32.totalorder %s73, %s74
      %p85 = scmp.eq.s32.totalorder %s18, 0
      %p86 = por %p84, %p85
      %p87 = scmp.ne.s32.totalorder %s73, %s74
      %p88 = scmp.eq.s32.totalorder %s19, 1
      %p89 = por %p87, %p88
      %p91 = scmp.ne.s32.totalorder %s74, %s90
      %p92 = scmp.eq.s32.totalorder %s19, 0
      %p93 = por %p91, %p92
      %s94 = ssub.s32 %s13, %s20
      %p95 = scmp.eq.s32.totalorder %s94, 0
      %s97 = sadd.s32 %s96, 1
      %s98 = scalar_select %p95, %s96, %s97
      %p101 = pneg %p95
      %p102 = scmp.eq.s32.totalorder %s13, 1
      %p103 = por %p101, %p102
      %p104 = scmp.ne.s32.totalorder %s96, %s99
      %p105 = scmp.eq.s32.totalorder %s13, 0
      %p106 = por %p104, %p105
      %p107 = scmp.ne.s32.totalorder %s96, %s99
      %p108 = scmp.eq.s32.totalorder %s18, 1
      %p109 = por %p107, %p108
      %p110 = scmp.ne.s32.totalorder %s99, %s100
      %p111 = scmp.eq.s32.totalorder %s18, 0
      %p112 = por %p110, %p111
      %p113 = scmp.ne.s32.totalorder %s99, %s100
      %p114 = scmp.eq.s32.totalorder %s19, 1
      %p115 = por %p113, %p114
      %p117 = scmp.ne.s32.totalorder %s100, %s116
      %p118 = scmp.eq.s32.totalorder %s19, 0
      %p119 = por %p117, %p118
      %p120 = scmp.le.s32.totalorder 1, %s13
      %p121 = scmp.lt.s32.totalorder %s13, 3
      %p122 = pnand %p120, %p121
      %p123 = pneg %p122
      // Predicated region
      $region9: #{tpu_custom_call.1} parent=5 // pred_check
        _
      $region10: #{tpu_custom_call.1} parent=5 // pred_check_branch
        %125 = sbr.rel (%p122) target = $region12
      $region11: #{tpu_custom_call.1} parent=5 // pred_region
        %s126 = ssub.s32 %s13, 1
        // Predicated region
        $region13: #{tpu_custom_call.1} parent=11 // pred_check
          %p127 = pneg %p60
        $region14: #{tpu_custom_call.1} parent=11 // pred_check_branch
          %129 = sbr.rel (%p127) target = $region16
        $region15: #{tpu_custom_call.1} parent=11 // pred_region
          %s131 = ssub.s32 1024, 1024
          %132 = vsyncadd [#allocation3], %s131
          %s133 = sshll.u32 [#allocation2], 4
          %s134 = int_to_ptr.vmem [resolvable:$true] %s133
          %139 = dma.hbm_to_vmem [thread:$0]  %s1, 1024, %s134, [#allocation3], 64, 64, 4
        $region16: #{tpu_custom_call.1} parent=11 // pred_fallthru
          _
      $region12: #{tpu_custom_call.1} parent=5 // pred_fallthru
        _
      %p140 = scmp.lt.s32.totalorder %s13, 2
      // Predicated region
      $region17: #{tpu_custom_call.1} parent=5 // pred_check
        %p141 = pneg %p140
      $region18: #{tpu_custom_call.1} parent=5 // pred_check_branch
        %143 = sbr.rel (%p141) target = $region20
      $region19: #{tpu_custom_call.1} parent=5 // pred_region
        // Predicated region
        $region21: #{tpu_custom_call.1} parent=19 // pred_check
          %p144 = pneg %p33
        $region22: #{tpu_custom_call.1} parent=19 // pred_check_branch
          %146 = sbr.rel (%p144) target = $region24
        $region23: #{tpu_custom_call.1} parent=19 // pred_region
          %s147 = smul.u32 2, %s13
          %p148 = scmp.lt.s32.totalorder %s147, 3
          %s149 = scalar_select %p148, %s147, 3
          %s150 = smul.addr %s149, 4
          %s151 = scalar_lea.vmem %s0, %s150
          %s152 = smul.u32 2, %s13
        $region24: #{tpu_custom_call.1} parent=19 // pred_fallthru
          _
        // Predicated region
        $region25: #{tpu_custom_call.1} parent=19 // pred_check
          %p153 = pneg %p80
        $region26: #{tpu_custom_call.1} parent=19 // pred_check_branch
          %155 = sbr.rel (%p153) target = $region28
        $region27: #{tpu_custom_call.1} parent=19 // pred_region
          %s156 = smul.u32 2, %s13
          %p157 = scmp.lt.s32.totalorder %s156, 3
          %s158 = scalar_select %p157, %s156, 3
          %s159 = smul.addr %s158, 8
          %s160 = scalar_lea.vmem %s2, %s159
          %s161 = smul.u32 2, %s13
        $region28: #{tpu_custom_call.1} parent=19 // pred_fallthru
          _
      $region20: #{tpu_custom_call.1} parent=5 // pred_fallthru
        _
      %p162 = scmp.le.s32.totalorder 1, %s13
      %p163 = scmp.lt.s32.totalorder %s13, 3
      %p164 = pnand %p162, %p163
      %p165 = pneg %p164
      // Predicated region
      $region29: #{tpu_custom_call.1} parent=5 // pred_check
        _
      $region30: #{tpu_custom_call.1} parent=5 // pred_check_branch
        %167 = sbr.rel (%p164) target = $region32
      $region31: #{tpu_custom_call.1} parent=5 // pred_region
        %s168 = ssub.s32 %s13, 1
        // Predicated region
        $region33: #{tpu_custom_call.1} parent=31 // pred_check
          %p169 = pneg %p60
        $region34: #{tpu_custom_call.1} parent=31 // pred_check_branch
          %171 = sbr.rel (%p169) target = $region36
        $region35: #{tpu_custom_call.1} parent=31 // pred_region
          %172 = dma.done [#allocation3], 1024
        $region36: #{tpu_custom_call.1} parent=31 // pred_fallthru
          _
        %s173 = smul.u32 2, %s18
        %p174 = scmp.lt.s32.totalorder %s173, 3
        %s175 = scalar_select %p174, %s173, 3
        %s176 = smul.addr %s175, 4
        %s177 = scalar_lea.vmem %s0, %s176
        %p178 = pneg %p39
        %p179 = pneg %p36
        %p180 = pneg %p60
        %p181 = pneg %p57
        %s182 = smul.u32 2, %s18
        %p183 = scmp.lt.s32.totalorder %s182, 3
        %s184 = scalar_select %p183, %s182, 3
        %s185 = smul.addr %s184, 8
        %s186 = scalar_lea.vmem %s2, %s185
        %p187 = pneg %p86
        %p188 = pneg %p83
        %p189 = pneg %p112
        %p190 = pneg %p109
        %s191 = sand.u32 %s99, 1
        %s192 = scalar_lea.sflag [#allocation4], %s191
        %s193 = sand.u32 %s99, 1
        %s194 = smul.addr %s193, 8
        %s195 = scalar_lea.vmem [#allocation5], %s194
        %s196 = smul.u32 2, %s18
        %p197 = scmp.lt.s32.totalorder %s196, 3
        %s198 = scalar_select %p197, %s196, 3
        %s199 = smul.addr %s198, 4
        %s200 = scalar_lea.vmem %s0, %s199
        %s201 = smul.u32 2, %s18
        %s202 = smul.u32 2, %s18
        %p203 = scmp.lt.s32.totalorder %s202, 3
        %s204 = scalar_select %p203, %s202, 3
        %s205 = smul.addr %s204, 8
        %s206 = scalar_lea.vmem %s2, %s205
        %s207 = smul.u32 2, %s18
        %s208 = smul.u32 2, %s18
        %v210 = vld [vmem:[%s200] sm:$0xf]
        %v211 = vld [vmem:[%s200 + $0x4] sm:$0xf]
        %v212 = vld [vmem:[#allocation2] sm:$0xf]
        %v213 = vld [vmem:[#allocation2 + $0x4] sm:$0xf]
        %v214 = vld [vmem:[#allocation2 + $0x8] sm:$0xf]
        %v215 = vld [vmem:[#allocation2 + $0xc] sm:$0xf]
        %v216 = vld [vmem:[#allocation2 + $0x10] sm:$0xf]
        %v217 = vld [vmem:[#allocation2 + $0x14] sm:$0xf]
        %v218 = vld [vmem:[#allocation2 + $0x18] sm:$0xf]
        %v219 = vld [vmem:[#allocation2 + $0x1c] sm:$0xf]
        %v220 = vld [vmem:[#allocation2 + $0x20] sm:$0xf]
        %v221 = vld [vmem:[#allocation2 + $0x24] sm:$0xf]
        %v222 = vld [vmem:[#allocation2 + $0x28] sm:$0xf]
        %v223 = vld [vmem:[#allocation2 + $0x2c] sm:$0xf]
        %v224 = vld [vmem:[#allocation2 + $0x30] sm:$0xf]
        %v225 = vld [vmem:[#allocation2 + $0x34] sm:$0xf]
        %v226 = vld [vmem:[#allocation2 + $0x38] sm:$0xf]
        %v227 = vld [vmem:[#allocation2 + $0x3c] sm:$0xf]
        %v230 = vunpack.c.l.b16 %v210
        %v231 = vunpack.c.l.b16 %v211
        %v232 = vpack.c.b16 %v231, %v230
        %v250 = vunpack.c.l.b16 %v212
        %v251 = vunpack.c.l.b16 %v213
        %v252 = vunpack.c.l.b16 %v214
        %v253 = vunpack.c.l.b16 %v215
        %v254 = vunpack.c.l.b16 %v216
        %v255 = vunpack.c.l.b16 %v217
        %v256 = vunpack.c.l.b16 %v218
        %v257 = vunpack.c.l.b16 %v219
        %v258 = vunpack.c.l.b16 %v220
        %v259 = vunpack.c.l.b16 %v221
        %v260 = vunpack.c.l.b16 %v222
        %v261 = vunpack.c.l.b16 %v223
        %v262 = vunpack.c.l.b16 %v224
        %v263 = vunpack.c.l.b16 %v225
        %v264 = vunpack.c.l.b16 %v226
        %v265 = vunpack.c.l.b16 %v227
        %v266 = vpack.c.b16 %v251, %v250
        %v267 = vpack.c.b16 %v253, %v252
        %v268 = vpack.c.b16 %v255, %v254
        %v269 = vpack.c.b16 %v257, %v256
        %v270 = vpack.c.b16 %v259, %v258
        %v271 = vpack.c.b16 %v261, %v260
        %v272 = vpack.c.b16 %v263, %v262
        %v273 = vpack.c.b16 %v265, %v264
        %282 = vmatprep.subr.bf16.mxu0 0
        %283 = vmatpush1.bf16.msra.mxu0 %v273
        %284 = vmatprep.subr.bf16.mxu0 0
        %285 = vmatpush1.bf16.msra.mxu0 %v272
        %286 = vmatprep.subr.bf16.mxu0 0
        %287 = vmatpush1.bf16.msra.mxu0 %v271
        %288 = vmatprep.subr.bf16.mxu0 0
        %289 = vmatpush1.bf16.msra.mxu0 %v270
        %290 = vmatprep.subr.bf16.mxu0 0
        %291 = vmatpush1.bf16.msra.mxu0 %v269
        %292 = vmatprep.subr.bf16.mxu0 0
        %293 = vmatpush1.bf16.msra.mxu0 %v268
        %294 = vmatprep.subr.bf16.mxu0 0
        %295 = vmatpush1.bf16.msra.mxu0 %v267
        %296 = vmatprep.subr.bf16.mxu0 0
        %297 = vmatpush1.bf16.msra.mxu0 %v266
        %298 = vmatprep.subr.bf16.mxu0 0
        %299 = vmatpush2.bf16.msra.mxu0 0
        %300 = vmatprep.subr.bf16.mxu0 0
        %301 = vmatpush2.bf16.msra.mxu0 0
        %302 = vmatprep.subr.bf16.mxu0 0
        %303 = vmatpush2.bf16.msra.mxu0 0
        %304 = vmatprep.subr.bf16.mxu0 0
        %305 = vmatpush2.bf16.msra.mxu0 0
        %306 = vmatprep.subr.bf16.mxu0 0
        %307 = vmatpush2.bf16.msra.mxu0 0
        %308 = vmatprep.subr.bf16.mxu0 0
        %309 = vmatpush2.bf16.msra.mxu0 0
        %310 = vmatprep.subr.bf16.mxu0 0
        %311 = vmatpush2.bf16.msra.mxu0 0
        %312 = vmatprep.subr.bf16.mxu0 0
        %313 = vmatpush2.bf16.msra.mxu0 0
        %314 = vmatprep.mubr.bf16.mxu0 0
        %315 = vmatmul.mubr.bf16.gmra.mxu0 %v232
        %v316 = vpop.f32.mrf.mxu0
        %v317 = vadd.f32 0.0, %v316
        %v318 = vpop.f32.mrf.mxu0
        %v319 = vpop.f32.mrf.mxu0
        %v320 = vadd.f32 0.0, %v319
        %v321 = vpop.f32.mrf.mxu0
        %322 = vdwg.mxu0
        %v323 = vld [vmem:[%s206] sm:$0xff]
        %v324 = vld [vmem:[%s206 + $0x8] sm:$0xff]
        %326 = vset.pattern.permute.xlu0 0
        %327 = vperm.xlu0 %326, %v323
        %v328 = vpop.permute.xlu0 %327
        %331 = vset.pattern.permute.xlu0 0
        %332 = vperm.xlu0 %331, %v324
        %v333 = vpop.permute.xlu0 %332
        %v335 = vmul.f32 %v317, %v328
        %v336 = vmul.f32 %v320, %v333
        %v337 = vpack.c.bf16 %v336, %v335
        %v339 = vunpack.c.l.b16 %v337
        %v340 = vunpack.c.h.b16 %v337
        %v341 = vpack.c.b16 %v339, %v339
        %v342 = vpack.c.b16 %v340, %v340
        %345 = vst [vmem:[%s195] sm:$0xf] %v341
        %346 = vst [vmem:[%s195 + $0x4] sm:$0xf] %v342
        %s347 = sand.u32 %s99, 1
        %s348 = scalar_lea.sflag [#allocation4], %s347
        %s349 = sand.u32 %s99, 1
        %s350 = smul.addr %s349, 8
        %s351 = scalar_lea.vmem [#allocation5], %s350
        // Predicated region
        $region37: #{tpu_custom_call.1} parent=31 // pred_check
          %p352 = pneg %p109
        $region38: #{tpu_custom_call.1} parent=31 // pred_check_branch
          %354 = sbr.rel (%p352) target = $region40
        $region39: #{tpu_custom_call.1} parent=31 // pred_region
          %s355 = smul.u32 2, %s18
          %s357 = ssub.s32 128, 128
          %358 = vsyncadd %s348, %s357
          %s359 = smul.addr %s355, 64
          %s360 = scalar_lea.hbm %s3, %s359
          %s361 = sshll.u32 %s351, 4
          %s362 = int_to_ptr.vmem [resolvable:$true] %s361
          %367 = dma.vmem_to_hbm [thread:$0]  %s362, 128, %s360, %s348, 64, 64, 4
        $region40: #{tpu_custom_call.1} parent=31 // pred_fallthru
          _
      $region32: #{tpu_custom_call.1} parent=5 // pred_fallthru
        _
      %p368 = scmp.le.s32.totalorder 2, %s13
      // Predicated region
      $region41: #{tpu_custom_call.1} parent=5 // pred_check
        %p369 = pneg %p368
      $region42: #{tpu_custom_call.1} parent=5 // pred_check_branch
        %371 = sbr.rel (%p369) target = $region44
      $region43: #{tpu_custom_call.1} parent=5 // pred_region
        %s372 = ssub.s32 %s13, 2
        // Predicated region
        $region45: #{tpu_custom_call.1} parent=43 // pred_check
          %p373 = pneg %p115
        $region46: #{tpu_custom_call.1} parent=43 // pred_check_branch
          %375 = sbr.rel (%p373) target = $region48
        $region47: #{tpu_custom_call.1} parent=43 // pred_region
          %s376 = sand.u32 %s100, 1
          %s377 = scalar_lea.sflag [#allocation4], %s376
          %s378 = sand.u32 %s100, 1
          %s379 = smul.addr %s378, 8
          %s380 = scalar_lea.vmem [#allocation5], %s379
          %381 = dma.done %s377, 128
        $region48: #{tpu_custom_call.1} parent=43 // pred_fallthru
          _
      $region44: #{tpu_custom_call.1} parent=5 // pred_fallthru
        _
    $region6: #{tpu_custom_call.1} parent=1 // loop_footer
      %s17 = sadd.s32 1, %s13
    $region7: #{tpu_custom_call.1} parent=1 // loop_footer_branch
      %12 = sbr.rel target = $region3
    $region8: #{tpu_custom_call.1} parent=1 // loop_exit
      _
    %382 = vsyncpa [#allocation3], 1
    %s383 = scalar_lea.sflag [#allocation3], 1
    %384 = vsyncpa %s383, 1
    %385 = vsyncpa [#allocation4], 1
    %s386 = scalar_lea.sflag [#allocation4], 1
    %387 = vsyncpa %s386, 1

</llo_original>
